<compile_context>
chip_gen: v7x
topology: tpu7x:2x2x1
jax: 0.10.0
libtpu: 0.0.40
codegen_flags: <defaults>
</compile_context>

<pallas_src>
import numpy as np
import jax
import jax.numpy as jnp
from jax.experimental import pallas as pl
from jax.experimental.pallas import tpu as pltpu

# ---- small, module-consistent hyperparameters ----
B = 2            # batch
C = 4            # num_channels
L = 32           # seq_len
P = 8            # pred_len
K = 5            # moving_avg kernel size (odd, like the default 25)
PAD = (K - 1) // 2
EPS = 1e-5       # eps_revin
AUX_ROWS = 8     # C colsum rows + 1 bias row, padded to one full sublane tile


def _balanced_sum(terms):
    """Sum a list of arrays as a balanced tree (cuts dependent add chains)."""
    terms = list(terms)
    while len(terms) > 1:
        nxt = [terms[i] + terms[i + 1] for i in range(0, len(terms) - 1, 2)]
        if len(terms) % 2:
            nxt.append(terms[-1])
        terms = nxt
    return terms[0]


def _dlinear_kernel(x_ref, w_ref, aux_ref, o_ref):
    """x_ref: (B, C, L) f32; w_ref: (C*L, C*P) folded affine map;
    aux_ref: (AUX_ROWS, C*P) rows [colsum_0..colsum_{C-1}, bias, 0...]; o_ref: (B, C*P)."""
    terms = []
    for c in range(C):                                        # static unroll over channels
        xc = x_ref[:, c, :]                                   # (B, L) per-channel slice

        # MXU dot on RAW x: independent of the RevIN stats below, so the VPU/EUP stat
        # chain overlaps with MXU latency in separate VLIW slots (linearity trick).
        d_c = jnp.dot(xc, w_ref[c * L:(c + 1) * L, :],
                      preferred_element_type=jnp.float32)     # (B, C*P)

        # RevIN stats: two-pass variance (no cancellation), eps inside sqrt, EUP rsqrt.
        # TODO(synk): RevIN source not provided; standard instance norm over the time axis
        # (biased variance, eps added to variance, affine=False, revout=False) is assumed.
        mean_c = jnp.mean(xc, axis=-1, keepdims=True)         # (B, 1)
        cen = xc - mean_c
        var_c = jnp.mean(cen * cen, axis=-1, keepdims=True)   # (B, 1)
        rstd_c = jax.lax.rsqrt(var_c + EPS)                   # (B, 1)

        # out contribution: rstd*(x@W_c) - (mean*rstd)*colsum_c
        terms.append(rstd_c * d_c - (mean_c * rstd_c) * aux_ref[c:c + 1, :])

    bias = aux_ref[C:C + 1, :]                                # (1, C*P)
    o_ref[...] = _balanced_sum(terms) + bias                  # single lane-dense store


@jax.jit
def dlinear_forward(x, w_full, aux):
    """x: (B, C, L) f32; w_full: (C*L, C*P) f32; aux: (AUX_ROWS, C*P) f32. Returns (B, C, P)."""
    out_flat = pl.pallas_call(
        _dlinear_kernel,
        out_shape=jax.ShapeDtypeStruct((B, C * P), jnp.float32),
        grid=(1,),                                            # single step: whole batch, one TC
        in_specs=[
            pl.BlockSpec((B, C, L), lambda i: (0, 0, 0)),         # x in its native layout
            pl.BlockSpec((C * L, C * P), lambda i: (0, 0)),       # folded weights (128, 32)
            pl.BlockSpec((AUX_ROWS, C * P), lambda i: (0, 0)),    # colsums + bias (8, 32)
        ],
        out_specs=pl.BlockSpec((B, C * P), lambda i: (0, 0)),
        compiler_params=pltpu.CompilerParams(dimension_semantics=("arbitrary",)),
    )(x, w_full, aux)
    return out_flat.reshape(B, C, P)                          # free channel-major unflatten


def fold_params(ws_t, bs, wt_t, bt, wh, bh):
    """Fold decomposition + seasonal/trend Linears + head Linear into one affine map.

    Everything downstream of RevIN is linear in xn, so it collapses exactly into
        out_cm[b, :] = xn_cm_flat[b, :] @ W_full + b_full
    in channel-major flatten order (index c*P + p).  Done in float64 numpy offline.
    Returns (W_full (C*L, C*P) f32, aux (AUX_ROWS, C*P) f32) where aux rows 0..C-1 are the
    per-channel column sums of W_full (for the mean-correction term) and row C is b_full.
    """
    ws64 = np.asarray(ws_t, np.float64)   # (L, P) = seasonal weight^T
    wt64 = np.asarray(wt_t, np.float64)   # (L, P) = trend weight^T
    bs64 = np.asarray(bs, np.float64)     # (P,)
    bt64 = np.asarray(bt, np.float64)     # (P,)
    wh64 = np.asarray(wh, np.float64)     # (P*C, P*C) torch layout (out, in), flatten p*C+c
    bh64 = np.asarray(bh, np.float64)     # (P*C,)

    # Moving-average matrix M (L, L) with replicate padding:  trend_row = xn_row @ M
    Mmat = np.zeros((L, L), np.float64)
    for t in range(L):
        for j in range(K):
            s = min(max(t + j - PAD, 0), L - 1)
            Mmat[s, t] += 1.0 / K

    W_comb = (np.eye(L) - Mmat) @ ws64 + Mmat @ wt64          # (L, P): decomp + both Linears
    b_comb = bs64 + bt64                                      # (P,)

    # Head params permuted to channel-major flatten order on both sides:
    #   wh_perm[c_in*P+p_in, c_out*P+p_out] = wh[p_out*C+c_out, p_in*C+c_in]
    wh_perm = wh64.reshape(P, C, P, C).transpose(3, 2, 1, 0).reshape(C * P, C * P)
    bh_perm = bh64.reshape(P, C).T.reshape(C * P)

    W_full = np.concatenate(
        [W_comb @ wh_perm[c * P:(c + 1) * P, :] for c in range(C)], axis=0)   # (C*L, C*P)
    b_full = bh_perm + np.tile(b_comb, C) @ wh_perm                           # (C*P,)

    assert C + 1 <= AUX_ROWS
    aux = np.zeros((AUX_ROWS, C * P), np.float64)
    for c in range(C):
        aux[c, :] = W_full[c * L:(c + 1) * L, :].sum(axis=0)  # colsum_c
    aux[C, :] = b_full

    return (jnp.asarray(W_full, dtype=jnp.float32),
            jnp.asarray(aux, dtype=jnp.float32))


def reference_forward(x, ws_t, bs, wt_t, bt, wh, bh):
    """Pure-JAX reference mirroring the PyTorch forward op-by-op (HIGHEST-precision matmuls)."""
    hp = jax.lax.Precision.HIGHEST
    mean = x.mean(-1, keepdims=True)
    var = ((x - mean) ** 2).mean(-1, keepdims=True)
    xn = (x - mean) / jnp.sqrt(var + EPS)                               # RevIN norm
    xp = jnp.pad(xn, ((0, 0), (0, 0), (PAD, PAD)), mode="edge")         # replicate pad (time)
    trend = sum(xp[:, :, j:j + L] for j in range(K)) / K                # moving average
    seasonal = xn - trend
    enc = (jnp.einsum("bcl,lp->bcp", seasonal, ws_t, precision=hp) + bs
           + jnp.einsum("bcl,lp->bcp", trend, wt_t, precision=hp) + bt)  # (B, C, P)
    out_pc = jnp.transpose(enc, (0, 2, 1))                              # (B, P, C)
    flat = out_pc.reshape(B, P * C)                                     # pred_len-major flatten
    head = jnp.einsum("bi,oi->bo", flat, wh, precision=hp) + bh         # torch Linear
    head = head.reshape(B, P, C)
    return jnp.transpose(head, (0, 2, 1))                               # (B, C, P)


if __name__ == "__main__":
    key = jax.random.PRNGKey(0)
    k_x, k_ws, k_wt, k_bs, k_bt, k_wh, k_bh = jax.random.split(key, 7)

    x = jax.random.normal(k_x, (B, C, L), dtype=jnp.float32)

    # Seasonal/trend Linear(seq_len->pred_len) weights, stored transposed (L, P).
    # The module initializes both to 1/seq_len * ones; small random deltas are added so the
    # test actually exercises the decomposition path (with identical weights it cancels).
    ws_t = (1.0 / L) + 0.05 * jax.random.normal(k_ws, (L, P), dtype=jnp.float32)
    wt_t = (1.0 / L) + 0.05 * jax.random.normal(k_wt, (L, P), dtype=jnp.float32)
    kb = float(1.0 / np.sqrt(L))
    bs = jax.random.uniform(k_bs, (P,), jnp.float32, -kb, kb)
    bt = jax.random.uniform(k_bt, (P,), jnp.float32, -kb, kb)

    # Head Linear(C*P -> C*P), torch layout (out, in); flatten order is p*C + c.
    kh = float(1.0 / np.sqrt(C * P))
    wh = jax.random.uniform(k_wh, (P * C, P * C), jnp.float32, -kh, kh)
    bh = jax.random.uniform(k_bh, (P * C,), jnp.float32, -kh, kh)

    w_full, aux = fold_params(ws_t, bs, wt_t, bt, wh, bh)

    out = dlinear_forward(x, w_full, aux)
    out = jax.block_until_ready(out)

    ref = reference_forward(x, ws_t, bs, wt_t, bt, wh, bh)
    assert out.shape == (B, C, P)
    max_err = float(jnp.max(jnp.abs(out - ref)))
    assert jnp.allclose(out, ref, atol=5e-3, rtol=5e-3), f"mismatch: max abs err = {max_err}"

    print("KERNEL_OK")
</pallas_src>

<mosaic_0001>
module attributes {stable_mosaic.version = 11 : i64} {
  func.func @_dlinear_kernel(%arg0: i32, %arg1: memref<2x4x32xf32, #tpu.memory_space<vmem>>, %arg2: memref<128x32xf32, #tpu.memory_space<vmem>>, %arg3: memref<8x32xf32, #tpu.memory_space<vmem>>, %arg4: memref<2x32xf32, #tpu.memory_space<vmem>>) attributes {dimension_semantics = [#tpu.dimension_semantics<arbitrary>], iteration_bounds = array<i64: 1>, scalar_prefetch = 0 : i64, scratch_operands = 0 : i64, tpu.core_type = #tpu.core_type<tc>, window_params = [{pipeline_mode = #tpu.pipeline_mode<synchronous>, transform_indices = @transform_0, window_bounds = array<i64: 2, 4, 32>}, {pipeline_mode = #tpu.pipeline_mode<synchronous>, transform_indices = @transform_1, window_bounds = array<i64: 128, 32>}, {pipeline_mode = #tpu.pipeline_mode<synchronous>, transform_indices = @transform_2, window_bounds = array<i64: 8, 32>}, {pipeline_mode = #tpu.pipeline_mode<synchronous>, transform_indices = @transform_3, window_bounds = array<i64: 2, 32>}]} {
    %c0 = arith.constant 0 : index
    %c0_0 = arith.constant 0 : index
    %c0_1 = arith.constant 0 : index
    %0 = vector.load %arg1[%c0, %c0_0, %c0_1] : memref<2x4x32xf32, #tpu.memory_space<vmem>>, vector<2x1x32xf32>
    %1 = vector.shape_cast %0 : vector<2x1x32xf32> to vector<2x32xf32>
    %c0_2 = arith.constant 0 : index
    %c0_3 = arith.constant 0 : index
    %2 = vector.load %arg2[%c0_2, %c0_3] : memref<128x32xf32, #tpu.memory_space<vmem>>, vector<32x32xf32>
    %cst = arith.constant dense<0.000000e+00> : vector<2x32xf32>
    %3 = tpu.matmul %1, %2, %cst {dimension_numbers = #tpu.dot_dimension_numbers<[1], [0], [0], [1], [0, 0, 1, 1], [], []>} : vector<2x32xf32>, vector<32x32xf32>, vector<2x32xf32> -> vector<2x32xf32>
    %cst_4 = arith.constant dense<0.000000e+00> : vector<2xf32>
    %4 = vector.multi_reduction <add>, %1, %cst_4 [1] : vector<2x32xf32> to vector<2xf32>
    %5 = vector.shape_cast %4 : vector<2xf32> to vector<2x1xf32>
    %cst_5 = arith.constant 3.200000e+01 : f32
    %6 = vector.broadcast %cst_5 : f32 to vector<2x1xf32>
    %7 = arith.divf %5, %6 : vector<2x1xf32>
    %8 = vector.broadcast %7 : vector<2x1xf32> to vector<2x32xf32>
    %9 = arith.subf %1, %8 : vector<2x32xf32>
    %10 = arith.mulf %9, %9 : vector<2x32xf32>
    %cst_6 = arith.constant dense<0.000000e+00> : vector<2xf32>
    %11 = vector.multi_reduction <add>, %10, %cst_6 [1] : vector<2x32xf32> to vector<2xf32>
    %12 = vector.shape_cast %11 : vector<2xf32> to vector<2x1xf32>
    %cst_7 = arith.constant 3.200000e+01 : f32
    %13 = vector.broadcast %cst_7 : f32 to vector<2x1xf32>
    %14 = arith.divf %12, %13 : vector<2x1xf32>
    %cst_8 = arith.constant 9.99999974E-6 : f32
    %15 = vector.broadcast %cst_8 : f32 to vector<2x1xf32>
    %16 = arith.addf %14, %15 : vector<2x1xf32>
    %17 = math.rsqrt %16 : vector<2x1xf32>
    %18 = vector.broadcast %17 : vector<2x1xf32> to vector<2x32xf32>
    %19 = arith.mulf %18, %3 : vector<2x32xf32>
    %20 = arith.mulf %7, %17 : vector<2x1xf32>
    %c0_9 = arith.constant 0 : index
    %c0_10 = arith.constant 0 : index
    %21 = vector.load %arg3[%c0_9, %c0_10] : memref<8x32xf32, #tpu.memory_space<vmem>>, vector<1x32xf32>
    %22 = vector.broadcast %20 : vector<2x1xf32> to vector<2x32xf32>
    %23 = vector.broadcast %21 : vector<1x32xf32> to vector<2x32xf32>
    %24 = arith.mulf %22, %23 : vector<2x32xf32>
    %25 = arith.subf %19, %24 : vector<2x32xf32>
    %c0_11 = arith.constant 0 : index
    %c1 = arith.constant 1 : index
    %c0_12 = arith.constant 0 : index
    %26 = vector.load %arg1[%c0_11, %c1, %c0_12] : memref<2x4x32xf32, #tpu.memory_space<vmem>>, vector<2x1x32xf32>
    %27 = vector.shape_cast %26 : vector<2x1x32xf32> to vector<2x32xf32>
    %c32 = arith.constant 32 : index
    %c0_13 = arith.constant 0 : index
    %28 = vector.load %arg2[%c32, %c0_13] : memref<128x32xf32, #tpu.memory_space<vmem>>, vector<32x32xf32>
    %cst_14 = arith.constant dense<0.000000e+00> : vector<2x32xf32>
    %29 = tpu.matmul %27, %28, %cst_14 {dimension_numbers = #tpu.dot_dimension_numbers<[1], [0], [0], [1], [0, 0, 1, 1], [], []>} : vector<2x32xf32>, vector<32x32xf32>, vector<2x32xf32> -> vector<2x32xf32>
    %cst_15 = arith.constant dense<0.000000e+00> : vector<2xf32>
    %30 = vector.multi_reduction <add>, %27, %cst_15 [1] : vector<2x32xf32> to vector<2xf32>
    %31 = vector.shape_cast %30 : vector<2xf32> to vector<2x1xf32>
    %cst_16 = arith.constant 3.200000e+01 : f32
    %32 = vector.broadcast %cst_16 : f32 to vector<2x1xf32>
    %33 = arith.divf %31, %32 : vector<2x1xf32>
    %34 = vector.broadcast %33 : vector<2x1xf32> to vector<2x32xf32>
    %35 = arith.subf %27, %34 : vector<2x32xf32>
    %36 = arith.mulf %35, %35 : vector<2x32xf32>
    %cst_17 = arith.constant dense<0.000000e+00> : vector<2xf32>
    %37 = vector.multi_reduction <add>, %36, %cst_17 [1] : vector<2x32xf32> to vector<2xf32>
    %38 = vector.shape_cast %37 : vector<2xf32> to vector<2x1xf32>
    %cst_18 = arith.constant 3.200000e+01 : f32
    %39 = vector.broadcast %cst_18 : f32 to vector<2x1xf32>
    %40 = arith.divf %38, %39 : vector<2x1xf32>
    %cst_19 = arith.constant 9.99999974E-6 : f32
    %41 = vector.broadcast %cst_19 : f32 to vector<2x1xf32>
    %42 = arith.addf %40, %41 : vector<2x1xf32>
    %43 = math.rsqrt %42 : vector<2x1xf32>
    %44 = vector.broadcast %43 : vector<2x1xf32> to vector<2x32xf32>
    %45 = arith.mulf %44, %29 : vector<2x32xf32>
    %46 = arith.mulf %33, %43 : vector<2x1xf32>
    %c1_20 = arith.constant 1 : index
    %c0_21 = arith.constant 0 : index
    %47 = vector.load %arg3[%c1_20, %c0_21] : memref<8x32xf32, #tpu.memory_space<vmem>>, vector<1x32xf32>
    %48 = vector.broadcast %46 : vector<2x1xf32> to vector<2x32xf32>
    %49 = vector.broadcast %47 : vector<1x32xf32> to vector<2x32xf32>
    %50 = arith.mulf %48, %49 : vector<2x32xf32>
    %51 = arith.subf %45, %50 : vector<2x32xf32>
    %c0_22 = arith.constant 0 : index
    %c2 = arith.constant 2 : index
    %c0_23 = arith.constant 0 : index
    %52 = vector.load %arg1[%c0_22, %c2, %c0_23] : memref<2x4x32xf32, #tpu.memory_space<vmem>>, vector<2x1x32xf32>
    %53 = vector.shape_cast %52 : vector<2x1x32xf32> to vector<2x32xf32>
    %c64 = arith.constant 64 : index
    %c0_24 = arith.constant 0 : index
    %54 = vector.load %arg2[%c64, %c0_24] : memref<128x32xf32, #tpu.memory_space<vmem>>, vector<32x32xf32>
    %cst_25 = arith.constant dense<0.000000e+00> : vector<2x32xf32>
    %55 = tpu.matmul %53, %54, %cst_25 {dimension_numbers = #tpu.dot_dimension_numbers<[1], [0], [0], [1], [0, 0, 1, 1], [], []>} : vector<2x32xf32>, vector<32x32xf32>, vector<2x32xf32> -> vector<2x32xf32>
    %cst_26 = arith.constant dense<0.000000e+00> : vector<2xf32>
    %56 = vector.multi_reduction <add>, %53, %cst_26 [1] : vector<2x32xf32> to vector<2xf32>
    %57 = vector.shape_cast %56 : vector<2xf32> to vector<2x1xf32>
    %cst_27 = arith.constant 3.200000e+01 : f32
    %58 = vector.broadcast %cst_27 : f32 to vector<2x1xf32>
    %59 = arith.divf %57, %58 : vector<2x1xf32>
    %60 = vector.broadcast %59 : vector<2x1xf32> to vector<2x32xf32>
    %61 = arith.subf %53, %60 : vector<2x32xf32>
    %62 = arith.mulf %61, %61 : vector<2x32xf32>
    %cst_28 = arith.constant dense<0.000000e+00> : vector<2xf32>
    %63 = vector.multi_reduction <add>, %62, %cst_28 [1] : vector<2x32xf32> to vector<2xf32>
    %64 = vector.shape_cast %63 : vector<2xf32> to vector<2x1xf32>
    %cst_29 = arith.constant 3.200000e+01 : f32
    %65 = vector.broadcast %cst_29 : f32 to vector<2x1xf32>
    %66 = arith.divf %64, %65 : vector<2x1xf32>
    %cst_30 = arith.constant 9.99999974E-6 : f32
    %67 = vector.broadcast %cst_30 : f32 to vector<2x1xf32>
    %68 = arith.addf %66, %67 : vector<2x1xf32>
    %69 = math.rsqrt %68 : vector<2x1xf32>
    %70 = vector.broadcast %69 : vector<2x1xf32> to vector<2x32xf32>
    %71 = arith.mulf %70, %55 : vector<2x32xf32>
    %72 = arith.mulf %59, %69 : vector<2x1xf32>
    %c2_31 = arith.constant 2 : index
    %c0_32 = arith.constant 0 : index
    %73 = vector.load %arg3[%c2_31, %c0_32] : memref<8x32xf32, #tpu.memory_space<vmem>>, vector<1x32xf32>
    %74 = vector.broadcast %72 : vector<2x1xf32> to vector<2x32xf32>
    %75 = vector.broadcast %73 : vector<1x32xf32> to vector<2x32xf32>
    %76 = arith.mulf %74, %75 : vector<2x32xf32>
    %77 = arith.subf %71, %76 : vector<2x32xf32>
    %c0_33 = arith.constant 0 : index
    %c3 = arith.constant 3 : index
    %c0_34 = arith.constant 0 : index
    %78 = vector.load %arg1[%c0_33, %c3, %c0_34] : memref<2x4x32xf32, #tpu.memory_space<vmem>>, vector<2x1x32xf32>
    %79 = vector.shape_cast %78 : vector<2x1x32xf32> to vector<2x32xf32>
    %c96 = arith.constant 96 : index
    %c0_35 = arith.constant 0 : index
    %80 = vector.load %arg2[%c96, %c0_35] : memref<128x32xf32, #tpu.memory_space<vmem>>, vector<32x32xf32>
    %cst_36 = arith.constant dense<0.000000e+00> : vector<2x32xf32>
    %81 = tpu.matmul %79, %80, %cst_36 {dimension_numbers = #tpu.dot_dimension_numbers<[1], [0], [0], [1], [0, 0, 1, 1], [], []>} : vector<2x32xf32>, vector<32x32xf32>, vector<2x32xf32> -> vector<2x32xf32>
    %cst_37 = arith.constant dense<0.000000e+00> : vector<2xf32>
    %82 = vector.multi_reduction <add>, %79, %cst_37 [1] : vector<2x32xf32> to vector<2xf32>
    %83 = vector.shape_cast %82 : vector<2xf32> to vector<2x1xf32>
    %cst_38 = arith.constant 3.200000e+01 : f32
    %84 = vector.broadcast %cst_38 : f32 to vector<2x1xf32>
    %85 = arith.divf %83, %84 : vector<2x1xf32>
    %86 = vector.broadcast %85 : vector<2x1xf32> to vector<2x32xf32>
    %87 = arith.subf %79, %86 : vector<2x32xf32>
    %88 = arith.mulf %87, %87 : vector<2x32xf32>
    %cst_39 = arith.constant dense<0.000000e+00> : vector<2xf32>
    %89 = vector.multi_reduction <add>, %88, %cst_39 [1] : vector<2x32xf32> to vector<2xf32>
    %90 = vector.shape_cast %89 : vector<2xf32> to vector<2x1xf32>
    %cst_40 = arith.constant 3.200000e+01 : f32
    %91 = vector.broadcast %cst_40 : f32 to vector<2x1xf32>
    %92 = arith.divf %90, %91 : vector<2x1xf32>
    %cst_41 = arith.constant 9.99999974E-6 : f32
    %93 = vector.broadcast %cst_41 : f32 to vector<2x1xf32>
    %94 = arith.addf %92, %93 : vector<2x1xf32>
    %95 = math.rsqrt %94 : vector<2x1xf32>
    %96 = vector.broadcast %95 : vector<2x1xf32> to vector<2x32xf32>
    %97 = arith.mulf %96, %81 : vector<2x32xf32>
    %98 = arith.mulf %85, %95 : vector<2x1xf32>
    %c3_42 = arith.constant 3 : index
    %c0_43 = arith.constant 0 : index
    %99 = vector.load %arg3[%c3_42, %c0_43] : memref<8x32xf32, #tpu.memory_space<vmem>>, vector<1x32xf32>
    %100 = vector.broadcast %98 : vector<2x1xf32> to vector<2x32xf32>
    %101 = vector.broadcast %99 : vector<1x32xf32> to vector<2x32xf32>
    %102 = arith.mulf %100, %101 : vector<2x32xf32>
    %103 = arith.subf %97, %102 : vector<2x32xf32>
    %c4 = arith.constant 4 : index
    %c0_44 = arith.constant 0 : index
    %104 = vector.load %arg3[%c4, %c0_44] : memref<8x32xf32, #tpu.memory_space<vmem>>, vector<1x32xf32>
    %105 = arith.addf %25, %51 : vector<2x32xf32>
    %106 = arith.addf %77, %103 : vector<2x32xf32>
    %107 = arith.addf %105, %106 : vector<2x32xf32>
    %108 = vector.broadcast %104 : vector<1x32xf32> to vector<2x32xf32>
    %109 = arith.addf %107, %108 : vector<2x32xf32>
    %c0_45 = arith.constant 0 : index
    %c0_46 = arith.constant 0 : index
    %110 = vector.load %arg4[%c0_45, %c0_46] : memref<2x32xf32, #tpu.memory_space<vmem>>, vector<2x32xf32>
    tpu.vector_store %arg4[%c0_45, %c0_46], %109 {strides = array<i32>} : memref<2x32xf32, #tpu.memory_space<vmem>>, vector<2x32xf32>,
    return
  }
  func.func @transform_0(%arg0: i32) -> (i32, i32, i32) {
    %c0_i32 = arith.constant 0 : i32
    %c0_i32_0 = arith.constant 0 : i32
    %c0_i32_1 = arith.constant 0 : i32
    %c0_i32_2 = arith.constant 0 : i32
    return %c0_i32, %c0_i32_0, %c0_i32_1 : i32, i32, i32
  }
  func.func @transform_1(%arg0: i32) -> (i32, i32) {
    %c0_i32 = arith.constant 0 : i32
    %c0_i32_0 = arith.constant 0 : i32
    %c0_i32_1 = arith.constant 0 : i32
    return %c0_i32, %c0_i32_0 : i32, i32
  }
  func.func @transform_2(%arg0: i32) -> (i32, i32) {
    %c0_i32 = arith.constant 0 : i32
    %c0_i32_0 = arith.constant 0 : i32
    %c0_i32_1 = arith.constant 0 : i32
    return %c0_i32, %c0_i32_0 : i32, i32
  }
  func.func @transform_3(%arg0: i32) -> (i32, i32) {
    %c0_i32 = arith.constant 0 : i32
    %c0_i32_0 = arith.constant 0 : i32
    %c0_i32_1 = arith.constant 0 : i32
    return %c0_i32, %c0_i32_0 : i32, i32
  }
}

</mosaic_0001>

<llo_original>
// kernel: dlinear_forward.1
$region0: #{dlinear_forward.1}
  #allocation0 [shape = 'u32[]', space=smem, size = 0x4, offset = 0x4, fixed_abs, tag = 'smem constant byte address 0x4 - core index']
  #allocation1 [shape = 'u32[144,128]{1,0:T(1,128)}', space=vmem, size = 0x12000, scoped, tag = 'internal scratch']
  %s0 = inlined_call_operand.vmem [shape: f32[2,4,32], index: 0, kind: input, shape index: {}]
  %s1 = inlined_call_operand.vmem [shape: f32[128,32], index: 1, kind: input, shape index: {}]
  %s2 = inlined_call_operand.vmem [shape: f32[8,32], index: 2, kind: input, shape index: {}]
  %s3 = inlined_call_operand.vmem [shape: f32[2,32], index: 3, kind: output, shape index: {}]
  %s4 = sld [smem:[#allocation0]]
  $region22: #{dlinear_forward.1} parent=0
    _
  %s6 = ssub.s32 1, %s4
  %s7 = scalar_select 0, %s6, %s4
  // Predicated region
  $region2: #{dlinear_forward.1} parent=0 // pred_check
    _
  $region3: #{dlinear_forward.1} parent=0 // pred_check_branch
    %9 = sbr.rel (0) target = $region5
  $region4: #{dlinear_forward.1} parent=0 // pred_region
    _
  $region5: #{dlinear_forward.1} parent=0 // pred_fallthru
    _
  // Predicated region
  $region6: #{dlinear_forward.1} parent=0 // pred_check
    _
  $region7: #{dlinear_forward.1} parent=0 // pred_check_branch
    %11 = sbr.rel (0) target = $region9
  $region8: #{dlinear_forward.1} parent=0 // pred_region
    _
  $region9: #{dlinear_forward.1} parent=0 // pred_fallthru
    _
  // Predicated region
  $region10: #{dlinear_forward.1} parent=0 // pred_check
    _
  $region11: #{dlinear_forward.1} parent=0 // pred_check_branch
    %13 = sbr.rel (0) target = $region13
  $region12: #{dlinear_forward.1} parent=0 // pred_region
    _
  $region13: #{dlinear_forward.1} parent=0 // pred_fallthru
    _
  %v14 = vld [vmem:[%s0] sm:$0x1]
  %v15 = vld [vmem:[%s0 + $0x4] sm:$0x1]
  %v16 = vld [vmem:[%s1] sm:$0xff]
  %v17 = vld [vmem:[%s1 + $0x8] sm:$0xff]
  %v18 = vld [vmem:[%s1 + $0x10] sm:$0xff]
  %v19 = vld [vmem:[%s1 + $0x18] sm:$0xff]
  %v22 = vrot.slane %v15, 7
  %vm23 = vcmask 1041409
  %v24 = vsel %vm23, %v22, %v14
  %vm25 = vcmask 261120
  %v26 = vsel %vm25, %v24, 0
  %28 = vmatprep.subr.mxu0 0.0
  %29 = vmatpush1.msra.mxu0 %v16
  %30 = vmatprep.subr.mxu0 0.0
  %31 = vmatpush1.msra.mxu0 %v17
  %32 = vmatprep.subr.mxu0 0.0
  %33 = vmatpush1.msra.mxu0 %v18
  %34 = vmatprep.subr.mxu0 0.0
  %35 = vmatpush1.msra.mxu0 %v19
  %36 = vmatprep.subr.mxu0 0.0
  %37 = vmatpush1.msra.mxu0 0.0
  %38 = vmatprep.subr.mxu0 0.0
  %39 = vmatpush1.msra.mxu0 0.0
  %40 = vmatprep.subr.mxu0 0.0
  %41 = vmatpush1.msra.mxu0 0.0
  %42 = vmatprep.subr.mxu0 0.0
  %43 = vmatpush1.msra.mxu0 0.0
  %44 = vmatprep.subr.mxu0 0.0
  %45 = vmatpush1.msra.mxu0 0.0
  %46 = vmatprep.subr.mxu0 0.0
  %47 = vmatpush1.msra.mxu0 0.0
  %48 = vmatprep.subr.mxu0 0.0
  %49 = vmatpush1.msra.mxu0 0.0
  %50 = vmatprep.subr.mxu0 0.0
  %51 = vmatpush1.msra.mxu0 0.0
  %52 = vmatprep.subr.mxu0 0.0
  %53 = vmatpush1.msra.mxu0 0.0
  %54 = vmatprep.subr.mxu0 0.0
  %55 = vmatpush1.msra.mxu0 0.0
  %56 = vmatprep.subr.mxu0 0.0
  %57 = vmatpush1.msra.mxu0 0.0
  %58 = vmatprep.subr.mxu0 0.0
  %59 = vmatpush1.msra.mxu0 0.0
  %60 = vmatprep.subr.mxu0 0.0
  %61 = vmatpush1.msra.mxu0 0.0
  %62 = vmatprep.subr.mxu0 0.0
  %63 = vmatpush1.msra.mxu0 0.0
  %64 = vmatprep.subr.mxu0 0.0
  %65 = vmatpush1.msra.mxu0 0.0
  %66 = vmatprep.subr.mxu0 0.0
  %67 = vmatpush1.msra.mxu0 0.0
  %68 = vmatprep.subr.mxu0 0.0
  %69 = vmatpush1.msra.mxu0 0.0
  %70 = vmatprep.subr.mxu0 0.0
  %71 = vmatpush1.msra.mxu0 0.0
  %72 = vmatprep.subr.mxu0 0.0
  %73 = vmatpush1.msra.mxu0 0.0
  %74 = vmatprep.subr.mxu0 0.0
  %75 = vmatpush1.msra.mxu0 0.0
  %76 = vmatprep.subr.mxu0 0.0
  %77 = vmatpush1.msra.mxu0 0.0
  %78 = vmatprep.subr.mxu0 0.0
  %79 = vmatpush1.msra.mxu0 0.0
  %80 = vmatprep.subr.mxu0 0.0
  %81 = vmatpush1.msra.mxu0 0.0
  %82 = vmatprep.subr.mxu0 0.0
  %83 = vmatpush1.msra.mxu0 0.0
  %84 = vmatprep.subr.mxu0 0.0
  %85 = vmatpush1.msra.mxu0 0.0
  %86 = vmatprep.subr.mxu0 0.0
  %87 = vmatpush1.msra.mxu0 0.0
  %88 = vmatprep.subr.mxu0 0.0
  %89 = vmatpush1.msra.mxu0 0.0
  %90 = vmatprep.subr.mxu0 0.0
  %91 = vmatpush1.msra.mxu0 0.0
  %92 = vmatprep.mubr.f32.mxu0 0.0
  %93 = vmatmul.mubr.f32.gmra.mrb[0].mxu0 %v26
  %v94 = vpop.f32.mrb[0].mxu0
  %v95 = vadd.f32 0.0, %v94
  %v96 = vpop.f32.mrb[0].mxu0
  %97 = vdwg.mxu0
  %vm99 = vcmask 254976
  %v100 = vsel %vm99, %v24, 0.0
  %101 = vadd.xlane.f32.xlu0 %v100
  %v102 = vpop.xlane.xlu0 %101
  %v103 = vrcp.pop 32.0
  %v104 = vmul.f32 %v102, %v103
  %v106 = vrot.slane %v104, 1
  %v109 = vsub.f32 %v14, %v104
  %v110 = vsub.f32 %v15, %v106
  %v111 = vmul.f32 %v109, %v109
  %v112 = vmul.f32 %v110, %v110
  %v115 = vrot.slane %v112, 7
  %v116 = vsel %vm23, %v115, %v111
  %v118 = vsel %vm99, %v116, 0.0
  %119 = vadd.xlane.f32.xlu0 %v118
  %v120 = vpop.xlane.xlu0 %119
  %v121 = vmul.f32 %v120, %v103
  %v122 = vadd.f32 %v121, 1e-05
  %v123 = vrsqrt.pop %v122
  %v124 = vmul.f32 %v123, %v95
  %v125 = vmul.f32 %v104, %v123
  %v126 = vld [vmem:[%s2] sm:$0x1]
  %v127 = vlaneseq
  %v128 = vshrl.u32 %v127, 7
  %v129 = vsub.s32 0, %v128
  %v130 = vrot.slane %v126, %v129
  %v131 = vmul.f32 %v125, %v130
  %v132 = vsub.f32 %v124, %v131
  %v133 = vld [vmem:[%s0 + $0x1] sm:$0x1]
  %v134 = vld [vmem:[%s0 + $0x5] sm:$0x1]
  %v135 = vld [vmem:[%s1 + $0x20] sm:$0xff]
  %v136 = vld [vmem:[%s1 + $0x28] sm:$0xff]
  %v137 = vld [vmem:[%s1 + $0x30] sm:$0xff]
  %v138 = vld [vmem:[%s1 + $0x38] sm:$0xff]
  %v141 = vrot.slane %v134, 7
  %v142 = vsel %vm23, %v141, %v133
  %v143 = vsel %vm25, %v142, 0
  %145 = vmatprep.subr.mxu0 0.0
  %146 = vmatpush1.msra.mxu0 %v135
  %147 = vmatprep.subr.mxu0 0.0
  %148 = vmatpush1.msra.mxu0 %v136
  %149 = vmatprep.subr.mxu0 0.0
  %150 = vmatpush1.msra.mxu0 %v137
  %151 = vmatprep.subr.mxu0 0.0
  %152 = vmatpush1.msra.mxu0 %v138
  %153 = vmatprep.subr.mxu0 0.0
  %154 = vmatpush1.msra.mxu0 0.0
  %155 = vmatprep.subr.mxu0 0.0
  %156 = vmatpush1.msra.mxu0 0.0
  %157 = vmatprep.subr.mxu0 0.0
  %158 = vmatpush1.msra.mxu0 0.0
  %159 = vmatprep.subr.mxu0 0.0
  %160 = vmatpush1.msra.mxu0 0.0
  %161 = vmatprep.subr.mxu0 0.0
  %162 = vmatpush1.msra.mxu0 0.0
  %163 = vmatprep.subr.mxu0 0.0
  %164 = vmatpush1.msra.mxu0 0.0
  %165 = vmatprep.subr.mxu0 0.0
  %166 = vmatpush1.msra.mxu0 0.0
  %167 = vmatprep.subr.mxu0 0.0
  %168 = vmatpush1.msra.mxu0 0.0
  %169 = vmatprep.subr.mxu0 0.0
  %170 = vmatpush1.msra.mxu0 0.0
  %171 = vmatprep.subr.mxu0 0.0
  %172 = vmatpush1.msra.mxu0 0.0
  %173 = vmatprep.subr.mxu0 0.0
  %174 = vmatpush1.msra.mxu0 0.0
  %175 = vmatprep.subr.mxu0 0.0
  %176 = vmatpush1.msra.mxu0 0.0
  %177 = vmatprep.subr.mxu0 0.0
  %178 = vmatpush1.msra.mxu0 0.0
  %179 = vmatprep.subr.mxu0 0.0
  %180 = vmatpush1.msra.mxu0 0.0
  %181 = vmatprep.subr.mxu0 0.0
  %182 = vmatpush1.msra.mxu0 0.0
  %183 = vmatprep.subr.mxu0 0.0
  %184 = vmatpush1.msra.mxu0 0.0
  %185 = vmatprep.subr.mxu0 0.0
  %186 = vmatpush1.msra.mxu0 0.0
  %187 = vmatprep.subr.mxu0 0.0
  %188 = vmatpush1.msra.mxu0 0.0
  %189 = vmatprep.subr.mxu0 0.0
  %190 = vmatpush1.msra.mxu0 0.0
  %191 = vmatprep.subr.mxu0 0.0
  %192 = vmatpush1.msra.mxu0 0.0
  %193 = vmatprep.subr.mxu0 0.0
  %194 = vmatpush1.msra.mxu0 0.0
  %195 = vmatprep.subr.mxu0 0.0
  %196 = vmatpush1.msra.mxu0 0.0
  %197 = vmatprep.subr.mxu0 0.0
  %198 = vmatpush1.msra.mxu0 0.0
  %199 = vmatprep.subr.mxu0 0.0
  %200 = vmatpush1.msra.mxu0 0.0
  %201 = vmatprep.subr.mxu0 0.0
  %202 = vmatpush1.msra.mxu0 0.0
  %203 = vmatprep.subr.mxu0 0.0
  %204 = vmatpush1.msra.mxu0 0.0
  %205 = vmatprep.subr.mxu0 0.0
  %206 = vmatpush1.msra.mxu0 0.0
  %207 = vmatprep.subr.mxu0 0.0
  %208 = vmatpush1.msra.mxu0 0.0
  %209 = vmatprep.mubr.f32.mxu0 0.0
  %210 = vmatmul.mubr.f32.gmra.mrb[0].mxu0 %v143
  %v211 = vpop.f32.mrb[0].mxu0
  %v212 = vadd.f32 0.0, %v211
  %v213 = vpop.f32.mrb[0].mxu0
  %214 = vdwg.mxu0
  %v216 = vsel %vm99, %v142, 0.0
  %217 = vadd.xlane.f32.xlu0 %v216
  %v218 = vpop.xlane.xlu0 %217
  %v219 = vmul.f32 %v218, %v103
  %v221 = vrot.slane %v219, 1
  %v224 = vsub.f32 %v133, %v219
  %v225 = vsub.f32 %v134, %v221
  %v226 = vmul.f32 %v224, %v224
  %v227 = vmul.f32 %v225, %v225
  %v230 = vrot.slane %v227, 7
  %v231 = vsel %vm23, %v230, %v226
  %v233 = vsel %vm99, %v231, 0.0
  %234 = vadd.xlane.f32.xlu0 %v233
  %v235 = vpop.xlane.xlu0 %234
  %v236 = vmul.f32 %v235, %v103
  %v237 = vadd.f32 %v236, 1e-05
  %v238 = vrsqrt.pop %v237
  %v239 = vmul.f32 %v238, %v212
  %v240 = vmul.f32 %v219, %v238
  %v241 = vld [vmem:[%s2 + $0x1] sm:$0x1]
  %v242 = vlaneseq
  %v243 = vshrl.u32 %v242, 7
  %v244 = vsub.s32 0, %v243
  %v245 = vrot.slane %v241, %v244
  %v246 = vmul.f32 %v240, %v245
  %v247 = vsub.f32 %v239, %v246
  %v248 = vld [vmem:[%s0 + $0x2] sm:$0x1]
  %v249 = vld [vmem:[%s0 + $0x6] sm:$0x1]
  %v250 = vld [vmem:[%s1 + $0x40] sm:$0xff]
  %v251 = vld [vmem:[%s1 + $0x48] sm:$0xff]
  %v252 = vld [vmem:[%s1 + $0x50] sm:$0xff]
  %v253 = vld [vmem:[%s1 + $0x58] sm:$0xff]
  %v256 = vrot.slane %v249, 7
  %v257 = vsel %vm23, %v256, %v248
  %v258 = vsel %vm25, %v257, 0
  %260 = vmatprep.subr.mxu0 0.0
  %261 = vmatpush1.msra.mxu0 %v250
  %262 = vmatprep.subr.mxu0 0.0
  %263 = vmatpush1.msra.mxu0 %v251
  %264 = vmatprep.subr.mxu0 0.0
  %265 = vmatpush1.msra.mxu0 %v252
  %266 = vmatprep.subr.mxu0 0.0
  %267 = vmatpush1.msra.mxu0 %v253
  %268 = vmatprep.subr.mxu0 0.0
  %269 = vmatpush1.msra.mxu0 0.0
  %270 = vmatprep.subr.mxu0 0.0
  %271 = vmatpush1.msra.mxu0 0.0
  %272 = vmatprep.subr.mxu0 0.0
  %273 = vmatpush1.msra.mxu0 0.0
  %274 = vmatprep.subr.mxu0 0.0
  %275 = vmatpush1.msra.mxu0 0.0
  %276 = vmatprep.subr.mxu0 0.0
  %277 = vmatpush1.msra.mxu0 0.0
  %278 = vmatprep.subr.mxu0 0.0
  %279 = vmatpush1.msra.mxu0 0.0
  %280 = vmatprep.subr.mxu0 0.0
  %281 = vmatpush1.msra.mxu0 0.0
  %282 = vmatprep.subr.mxu0 0.0
  %283 = vmatpush1.msra.mxu0 0.0
  %284 = vmatprep.subr.mxu0 0.0
  %285 = vmatpush1.msra.mxu0 0.0
  %286 = vmatprep.subr.mxu0 0.0
  %287 = vmatpush1.msra.mxu0 0.0
  %288 = vmatprep.subr.mxu0 0.0
  %289 = vmatpush1.msra.mxu0 0.0
  %290 = vmatprep.subr.mxu0 0.0
  %291 = vmatpush1.msra.mxu0 0.0
  %292 = vmatprep.subr.mxu0 0.0
  %293 = vmatpush1.msra.mxu0 0.0
  %294 = vmatprep.subr.mxu0 0.0
  %295 = vmatpush1.msra.mxu0 0.0
  %296 = vmatprep.subr.mxu0 0.0
  %297 = vmatpush1.msra.mxu0 0.0
  %298 = vmatprep.subr.mxu0 0.0
  %299 = vmatpush1.msra.mxu0 0.0
  %300 = vmatprep.subr.mxu0 0.0
  %301 = vmatpush1.msra.mxu0 0.0
  %302 = vmatprep.subr.mxu0 0.0
  %303 = vmatpush1.msra.mxu0 0.0
  %304 = vmatprep.subr.mxu0 0.0
  %305 = vmatpush1.msra.mxu0 0.0
  %306 = vmatprep.subr.mxu0 0.0
  %307 = vmatpush1.msra.mxu0 0.0
  %308 = vmatprep.subr.mxu0 0.0
  %309 = vmatpush1.msra.mxu0 0.0
  %310 = vmatprep.subr.mxu0 0.0
  %311 = vmatpush1.msra.mxu0 0.0
  %312 = vmatprep.subr.mxu0 0.0
  %313 = vmatpush1.msra.mxu0 0.0
  %314 = vmatprep.subr.mxu0 0.0
  %315 = vmatpush1.msra.mxu0 0.0
  %316 = vmatprep.subr.mxu0 0.0
  %317 = vmatpush1.msra.mxu0 0.0
  %318 = vmatprep.subr.mxu0 0.0
  %319 = vmatpush1.msra.mxu0 0.0
  %320 = vmatprep.subr.mxu0 0.0
  %321 = vmatpush1.msra.mxu0 0.0
  %322 = vmatprep.subr.mxu0 0.0
  %323 = vmatpush1.msra.mxu0 0.0
  %324 = vmatprep.mubr.f32.mxu0 0.0
  %325 = vmatmul.mubr.f32.gmra.mrb[0].mxu0 %v258
  %v326 = vpop.f32.mrb[0].mxu0
  %v327 = vadd.f32 0.0, %v326
  %v328 = vpop.f32.mrb[0].mxu0
  %329 = vdwg.mxu0
  %v331 = vsel %vm99, %v257, 0.0
  %332 = vadd.xlane.f32.xlu0 %v331
  %v333 = vpop.xlane.xlu0 %332
  %v334 = vmul.f32 %v333, %v103
  %v336 = vrot.slane %v334, 1
  %v339 = vsub.f32 %v248, %v334
  %v340 = vsub.f32 %v249, %v336
  %v341 = vmul.f32 %v339, %v339
  %v342 = vmul.f32 %v340, %v340
  %v345 = vrot.slane %v342, 7
  %v346 = vsel %vm23, %v345, %v341
  %v348 = vsel %vm99, %v346, 0.0
  %349 = vadd.xlane.f32.xlu0 %v348
  %v350 = vpop.xlane.xlu0 %349
  %v351 = vmul.f32 %v350, %v103
  %v352 = vadd.f32 %v351, 1e-05
  %v353 = vrsqrt.pop %v352
  %v354 = vmul.f32 %v353, %v327
  %v355 = vmul.f32 %v334, %v353
  %v356 = vld [vmem:[%s2 + $0x2] sm:$0x1]
  %v357 = vlaneseq
  %v358 = vshrl.u32 %v357, 7
  %v359 = vsub.s32 0, %v358
  %v360 = vrot.slane %v356, %v359
  %v361 = vmul.f32 %v355, %v360
  %v362 = vsub.f32 %v354, %v361
  %v363 = vld [vmem:[%s0 + $0x3] sm:$0x1]
  %v364 = vld [vmem:[%s0 + $0x7] sm:$0x1]
  %v365 = vld [vmem:[%s1 + $0x60] sm:$0xff]
  %v366 = vld [vmem:[%s1 + $0x68] sm:$0xff]
  %v367 = vld [vmem:[%s1 + $0x70] sm:$0xff]
  %v368 = vld [vmem:[%s1 + $0x78] sm:$0xff]
  %v371 = vrot.slane %v364, 7
  %v372 = vsel %vm23, %v371, %v363
  %v373 = vsel %vm25, %v372, 0
  %375 = vmatprep.subr.mxu0 0.0
  %376 = vmatpush1.msra.mxu0 %v365
  %377 = vmatprep.subr.mxu0 0.0
  %378 = vmatpush1.msra.mxu0 %v366
  %379 = vmatprep.subr.mxu0 0.0
  %380 = vmatpush1.msra.mxu0 %v367
  %381 = vmatprep.subr.mxu0 0.0
  %382 = vmatpush1.msra.mxu0 %v368
  %383 = vmatprep.subr.mxu0 0.0
  %384 = vmatpush1.msra.mxu0 0.0
  %385 = vmatprep.subr.mxu0 0.0
  %386 = vmatpush1.msra.mxu0 0.0
  %387 = vmatprep.subr.mxu0 0.0
  %388 = vmatpush1.msra.mxu0 0.0
  %389 = vmatprep.subr.mxu0 0.0
  %390 = vmatpush1.msra.mxu0 0.0
  %391 = vmatprep.subr.mxu0 0.0
  %392 = vmatpush1.msra.mxu0 0.0
  %393 = vmatprep.subr.mxu0 0.0
  %394 = vmatpush1.msra.mxu0 0.0
  %395 = vmatprep.subr.mxu0 0.0
  %396 = vmatpush1.msra.mxu0 0.0
  %397 = vmatprep.subr.mxu0 0.0
  %398 = vmatpush1.msra.mxu0 0.0
  %399 = vmatprep.subr.mxu0 0.0
  %400 = vmatpush1.msra.mxu0 0.0
  %401 = vmatprep.subr.mxu0 0.0
  %402 = vmatpush1.msra.mxu0 0.0
  %403 = vmatprep.subr.mxu0 0.0
  %404 = vmatpush1.msra.mxu0 0.0
  %405 = vmatprep.subr.mxu0 0.0
  %406 = vmatpush1.msra.mxu0 0.0
  %407 = vmatprep.subr.mxu0 0.0
  %408 = vmatpush1.msra.mxu0 0.0
  %409 = vmatprep.subr.mxu0 0.0
  %410 = vmatpush1.msra.mxu0 0.0
  %411 = vmatprep.subr.mxu0 0.0
  %412 = vmatpush1.msra.mxu0 0.0
  %413 = vmatprep.subr.mxu0 0.0
  %414 = vmatpush1.msra.mxu0 0.0
  %415 = vmatprep.subr.mxu0 0.0
  %416 = vmatpush1.msra.mxu0 0.0
  %417 = vmatprep.subr.mxu0 0.0
  %418 = vmatpush1.msra.mxu0 0.0
  %419 = vmatprep.subr.mxu0 0.0
  %420 = vmatpush1.msra.mxu0 0.0
  %421 = vmatprep.subr.mxu0 0.0
  %422 = vmatpush1.msra.mxu0 0.0
  %423 = vmatprep.subr.mxu0 0.0
  %424 = vmatpush1.msra.mxu0 0.0
  %425 = vmatprep.subr.mxu0 0.0
  %426 = vmatpush1.msra.mxu0 0.0
  %427 = vmatprep.subr.mxu0 0.0
  %428 = vmatpush1.msra.mxu0 0.0
  %429 = vmatprep.subr.mxu0 0.0
  %430 = vmatpush1.msra.mxu0 0.0
  %431 = vmatprep.subr.mxu0 0.0
  %432 = vmatpush1.msra.mxu0 0.0
  %433 = vmatprep.subr.mxu0 0.0
  %434 = vmatpush1.msra.mxu0 0.0
  %435 = vmatprep.subr.mxu0 0.0
  %436 = vmatpush1.msra.mxu0 0.0
  %437 = vmatprep.subr.mxu0 0.0
  %438 = vmatpush1.msra.mxu0 0.0
  %439 = vmatprep.mubr.f32.mxu0 0.0
  %440 = vmatmul.mubr.f32.gmra.mrb[0].mxu0 %v373
  %v441 = vpop.f32.mrb[0].mxu0
  %v442 = vadd.f32 0.0, %v441
  %v443 = vpop.f32.mrb[0].mxu0
  %444 = vdwg.mxu0
  %v446 = vsel %vm99, %v372, 0.0
  %447 = vadd.xlane.f32.xlu0 %v446
  %v448 = vpop.xlane.xlu0 %447
  %v449 = vmul.f32 %v448, %v103
  %v451 = vrot.slane %v449, 1
  %v454 = vsub.f32 %v363, %v449
  %v455 = vsub.f32 %v364, %v451
  %v456 = vmul.f32 %v454, %v454
  %v457 = vmul.f32 %v455, %v455
  %v460 = vrot.slane %v457, 7
  %v461 = vsel %vm23, %v460, %v456
  %v463 = vsel %vm99, %v461, 0.0
  %464 = vadd.xlane.f32.xlu0 %v463
  %v465 = vpop.xlane.xlu0 %464
  %v466 = vmul.f32 %v465, %v103
  %v467 = vadd.f32 %v466, 1e-05
  %v468 = vrsqrt.pop %v467
  %v469 = vmul.f32 %v468, %v442
  %v470 = vmul.f32 %v449, %v468
  %v471 = vld [vmem:[%s2 + $0x3] sm:$0x1]
  %v472 = vlaneseq
  %v473 = vshrl.u32 %v472, 7
  %v474 = vsub.s32 0, %v473
  %v475 = vrot.slane %v471, %v474
  %v476 = vmul.f32 %v470, %v475
  %v477 = vsub.f32 %v469, %v476
  %v478 = vld [vmem:[%s2 + $0x4] sm:$0x1]
  %v479 = vadd.f32 %v132, %v247
  %v480 = vadd.f32 %v362, %v477
  %v481 = vadd.f32 %v479, %v480
  %v482 = vlaneseq
  %v483 = vshrl.u32 %v482, 7
  %v484 = vsub.s32 0, %v483
  %v485 = vrot.slane %v478, %v484
  %v486 = vadd.f32 %v481, %v485
  %487 = vst.msk [vmem:[%s3] sm:$0x3] %vm99, %v486
  // Predicated region
  $region14: #{dlinear_forward.1} parent=0 // pred_check
    _
  $region15: #{dlinear_forward.1} parent=0 // pred_check_branch
    %489 = sbr.rel (0) target = $region17
  $region16: #{dlinear_forward.1} parent=0 // pred_region
    _
  $region17: #{dlinear_forward.1} parent=0 // pred_fallthru
    _
  // Predicated region
  $region18: #{dlinear_forward.1} parent=0 // pred_check
    _
  $region19: #{dlinear_forward.1} parent=0 // pred_check_branch
    %491 = sbr.rel (0) target = $region21
  $region20: #{dlinear_forward.1} parent=0 // pred_region
    _
  $region21: #{dlinear_forward.1} parent=0 // pred_fallthru
    _

</llo_original>
